<compile_context>
chip_gen: v7x
topology: tpu7x:2x2x1
jax: 0.10.0
libtpu: 0.0.40
codegen_flags: <defaults>
</compile_context>

<pallas_src>
import math

import numpy as np
import jax
import jax.numpy as jnp
from jax.experimental import pallas as pl
from jax.experimental.pallas import tpu as pltpu


# --------------------------- static matrix helpers -------------------------- #

def adaptive_pool_membership(H, W, s):
    """0/1 membership matrix Mb[k, h*W+w] (exact in bf16) + per-bin 1/area."""
    Mb = np.zeros((s * s, H * W), np.float32)
    inv = np.zeros((s * s,), np.float32)
    for i in range(s):
        h0, h1 = (i * H) // s, math.ceil((i + 1) * H / s)
        for j in range(s):
            w0, w1 = (j * W) // s, math.ceil((j + 1) * W / s)
            inv[i * s + j] = 1.0 / ((h1 - h0) * (w1 - w0))
            for hh in range(h0, h1):
                Mb[i * s + j, hh * W + w0:hh * W + w1] = 1.0
    return Mb, inv


def bilinear_matrix_1d(out_size, in_size):
    """1-D bilinear interpolation weights, align_corners=True (PyTorch)."""
    U = np.zeros((out_size, in_size), np.float32)
    if in_size == 1:
        U[:, 0] = 1.0
        return U
    scale = (in_size - 1) / (out_size - 1)
    for o in range(out_size):
        src = o * scale
        i0 = min(int(math.floor(src)), in_size - 1)
        i1 = min(i0 + 1, in_size - 1)
        f = src - i0
        U[o, i0] += 1.0 - f
        U[o, i1] += f
    return U


def fold_bn(p, eps=1e-5):
    """Fold eval-mode BatchNorm + conv bias into (scale, bias)."""
    scale = p["gamma"] / jnp.sqrt(p["var"] + eps)
    bias = p["beta"] + (p["b"] - p["mean"]) * scale
    return jnp.stack([scale, bias], axis=0)  # (2, C)


def _bytes(shape, dtype):
    return int(np.prod(shape)) * jnp.dtype(dtype).itemsize


def _vmem_capacity():
    try:
        return int(pltpu.get_tpu_info().vmem_capacity_bytes)
    except Exception:
        return 64 << 20            # conservative (v7x per-core)


def _vmem_limit(blocks, scratch=()):
    """Honest scoped-VMEM request: 2x (double buffer) per block + scratch."""
    need = sum(2 * _bytes(s, d) for s, d in blocks)
    need += sum(_bytes(s, d) for s, d in scratch)
    need += 4 << 20                                  # compute / pipeline headroom
    cap = _vmem_capacity()
    return int(min(max(need, 16 << 20), cap * 7 // 8))


def _hw_tile_limit():
    """Bigger HW tiles on 128 MiB parts (v5e/v6e), smaller on 64 MiB (v7x)."""
    return 8192 if _vmem_capacity() >= (96 << 20) else 4096


def _largest_tile(total, limit, quantum=128):
    """Largest multiple of `quantum` that divides `total` and is <= limit."""
    best = None
    t = quantum
    while t <= min(total, limit):
        if total % t == 0:
            best = t
        t += quantum
    return best if best is not None else total


# ----------------------------- Pallas kernels ------------------------------ #

def pool_sum_kernel(a_ref, x_ref, pp_ref):
    # a_ref : (1, K_total, THW) bf16  0/1 membership tile
    # x_ref : (1, THW, Cin)     bf16  activation tile (HW reduction axis)
    # pp_ref: (1, K_total, Cin) f32   partial per-bin sums (resident over k)
    k = pl.program_id(1)
    part = jnp.dot(a_ref[0], x_ref[0], preferred_element_type=jnp.float32)

    @pl.when(k == 0)
    def _():
        pp_ref[0] = part

    @pl.when(k != 0)
    def _():
        pp_ref[0] = pp_ref[0] + part


def make_epilogue_kernel(pool_scales, hid, chunks):
    """1/area scale -> per-scale 1x1 conv + BN + ReLU -> one fold matmul -> G."""
    offs, o = [], 0
    for s in pool_scales:
        offs.append(o)
        o += s * s

    def epilogue_kernel(pp_ref, inv_ref, w_ref, sb_ref, wku_ref, g_ref, yblk_sc):
        # pp_ref : (1, CHUNKS, K_total, Cin) f32   partial pooled sums
        # inv_ref: (K_total, 1) f32                1/area per bin
        # w_ref  : (ns, Cin, hid) f32              1x1 conv weights
        # sb_ref : (ns, 2, hid) f32                folded BN per scale
        # wku_ref: (ns*hid, 9*Coutp) f32           pyramid 3x3 weights, col=tap*Coutp+c
        # g_ref  : (1, K_total, 9*Coutp) f32       folded per-(bin, tap) weights
        pooled = pp_ref[0, 0]
        for c in range(1, chunks):
            pooled = pooled + pp_ref[0, c]
        pooled = pooled * inv_ref[...]                      # exact adaptive mean
        yblk_sc[...] = jnp.zeros_like(yblk_sc)
        for i, s in enumerate(pool_scales):
            s2, off = s * s, offs[i]
            y = jnp.dot(pooled[off:off + s2, :], w_ref[i],
                        preferred_element_type=jnp.float32)
            y = jnp.maximum(y * sb_ref[i, 0:1, :] + sb_ref[i, 1:2, :], 0.0)
            yblk_sc[off:off + s2, i * hid:(i + 1) * hid] = y
        g_ref[0] = jnp.dot(yblk_sc[...], wku_ref[...],
                           preferred_element_type=jnp.float32)

    return epilogue_kernel


def make_fusion_kernel(Wfp, M):
    """3x3 conv + folded BN + ReLU on a halo row-slab; pyramid branch folded into
    one dense bf16 matmul that also initializes the accumulator."""
    def fusion_kernel(xp_ref, up_ref, g_ref, wkx_ref, sb_ref, out_ref):
        # xp_ref : (1, SLAB, Cin)     bf16  halo slab of the zero-padded image
        # up_ref : (M, 9*K_total)     bf16  tap-folded bilinear upsample rows
        # g_ref  : (1, 9*K_total, Coutp) bf16
        # wkx_ref: (9, Cin, Coutp)    bf16  3x3 weights, x channels
        # sb_ref : (2, Coutp)         f32   folded BN scale / bias
        # out_ref: (1, M, Coutp)      bf16  M = TH*Wfp flattened output rows
        acc = jnp.dot(up_ref[...], g_ref[0], preferred_element_type=jnp.float32)
        for dy in range(3):
            for dx in range(3):
                tap = dy * 3 + dx
                start = dy * Wfp + dx            # static, dy*Wfp is 8-aligned
                acc = acc + jnp.dot(xp_ref[0, start:start + M, :], wkx_ref[tap],
                                    preferred_element_type=jnp.float32)
        out_ref[0] = jnp.maximum(acc * sb_ref[0:1, :] + sb_ref[1:2, :],
                                 0.0).astype(out_ref.dtype)

    return fusion_kernel


# ------------------------------ parameter init ------------------------------ #

def init_params(key, in_channel, out_channel, pool_scales):
    hid = in_channel // 4
    c2 = in_channel + hid * len(pool_scales)
    keys = jax.random.split(key, len(pool_scales) + 1)

    def bn_pack(k, cout, kshape):
        kw, kb, kg, kbe, km, kv = jax.random.split(k, 6)
        return dict(
            w=0.05 * jax.random.normal(kw, kshape, jnp.float32),
            b=0.05 * jax.random.normal(kb, (cout,), jnp.float32),
            gamma=1.0 + 0.1 * jax.random.normal(kg, (cout,), jnp.float32),
            beta=0.1 * jax.random.normal(kbe, (cout,), jnp.float32),
            mean=0.05 * jax.random.normal(km, (cout,), jnp.float32),
            var=1.0 + 0.1 * jnp.abs(jax.random.normal(kv, (cout,), jnp.float32)),
        )

    pool_params = [bn_pack(k, hid, (in_channel, hid)) for k in keys[:-1]]
    fusion = bn_pack(keys[-1], out_channel, (3, 3, c2, out_channel))  # HWIO
    return {"pool": pool_params, "fusion": fusion}


# -------------------------------- forward pass ------------------------------ #

def pyramid_pooling_module(x_nchw, params, pool_scales):
    N, Cin, H, W = x_nchw.shape
    hid = Cin // 4
    ns = len(pool_scales)
    HW = H * W
    Cout = params["fusion"]["w"].shape[-1]
    Coutp = ((Cout + 127) // 128) * 128
    k_total = sum(s * s for s in pool_scales)
    k9 = 9 * k_total
    Wfp = ((W + 2 + 7) // 8) * 8                       # lane-row padded width
    TH = next(c for c in (16, 8, 4, 2, 1) if H % c == 0)
    n_rt = H // TH
    M = TH * Wfp                                       # output rows per fusion step
    SLAB = (TH + 3) * Wfp                              # halo slab rows (flattened)

    # ---- static pooling / upsample matrices (host-side numpy) ----
    memb_l, inv_l = [], []
    for s in pool_scales:
        mb, inv = adaptive_pool_membership(H, W, s)
        memb_l.append(mb)
        inv_l.append(inv)
    memb = np.concatenate(memb_l, 0)                   # (k_total, HW) 0/1
    inv_area = jnp.asarray(np.concatenate(inv_l, 0).reshape(k_total, 1))

    U_cols = []
    for s in pool_scales:
        Uh = bilinear_matrix_1d(H, s)
        Uw = bilinear_matrix_1d(W, s)
        U_cols.append(np.einsum("hi,wj->hwij", Uh, Uw).reshape(HW, s * s))
    U_all = np.concatenate(U_cols, 1).astype(np.float32)        # (HW, k_total)
    # Tap-folded, zero-padded bilinear matrix: Up3[r*Wfp+c, k*9+tap] = Up[r+dy, c+dx, k]
    Up_img = np.zeros((H + 3, Wfp + 2, k_total), np.float32)
    Up_img[1:H + 1, 1:W + 1, :] = U_all.reshape(H, W, k_total)
    Up3 = np.zeros((H * Wfp, k_total, 9), np.float32)
    for dy in range(3):
        for dx in range(3):
            Up3[:, :, dy * 3 + dx] = Up_img[dy:dy + H, dx:dx + Wfp, :].reshape(
                H * Wfp, k_total)
    Up3 = jnp.asarray(Up3.reshape(H * Wfp, k9), jnp.bfloat16)

    # ---- HW chunking (second parallel axis for kernel A, helps v7x at N=1) ----
    CHUNKS = 2 if HW % 256 == 0 else 1
    HWc = HW // CHUNKS
    THW = _largest_tile(HWc, limit=_hw_tile_limit(), quantum=128)
    n_hw = HWc // THW
    A_c = jnp.asarray(memb.reshape(k_total, CHUNKS, HWc).transpose(1, 0, 2),
                      jnp.bfloat16)                    # (CHUNKS, k_total, HWc)

    # ---- activations: channels-last, bf16 ----
    x_nhwc = jnp.transpose(x_nchw, (0, 2, 3, 1)).astype(jnp.bfloat16)   # (N,H,W,Cin)
    xf_c = x_nhwc.reshape(N * CHUNKS, HWc, Cin)
    # zero-padded image + per-row-tile halo slabs (halo rows duplicated per tile)
    xpad = jnp.zeros((N, H + 3, Wfp, Cin), jnp.bfloat16)
    xpad = xpad.at[:, 1:H + 1, 1:W + 1, :].set(x_nhwc)
    row_idx = np.arange(n_rt)[:, None] * TH + np.arange(TH + 3)[None, :]
    xp_tiles = xpad[:, row_idx].reshape(N * n_rt, SLAB, Cin)

    # ---- parameters (small ones stay f32; big streaming operands bf16) ----
    w_all = jnp.stack([p["w"] for p in params["pool"]], 0)              # (ns,Cin,hid)
    sb_all = jnp.stack([fold_bn(p) for p in params["pool"]], 0)         # (ns,2,hid)
    W3 = params["fusion"]["w"].reshape(9, Cin + ns * hid, Cout)
    wkx = (jnp.zeros((9, Cin, Coutp), jnp.float32)
           .at[:, :, :Cout].set(W3[:, :Cin, :]).astype(jnp.bfloat16))
    wku9 = (jnp.zeros((9, ns * hid, Coutp), jnp.float32)
            .at[:, :, :Cout].set(W3[:, Cin:, :]))
    wku9 = jnp.transpose(wku9, (1, 0, 2)).reshape(ns * hid, 9 * Coutp)  # col=tap*Coutp+c
    sb2 = jnp.zeros((2, Coutp), jnp.float32).at[:, :Cout].set(fold_bn(params["fusion"]))

    # ---- kernel A: bf16 streaming pool-sum, HW reduced once ----
    pool_blocks = [((1, k_total, THW), jnp.bfloat16),
                   ((1, THW, Cin), jnp.bfloat16),
                   ((1, k_total, Cin), jnp.float32)]
    pp = pl.pallas_call(
        pool_sum_kernel,
        out_shape=jax.ShapeDtypeStruct((N * CHUNKS, k_total, Cin), jnp.float32),
        grid=(N * CHUNKS, n_hw),
        in_specs=[
            pl.BlockSpec((1, k_total, THW), lambda nc, k: (nc % CHUNKS, 0, k)),
            pl.BlockSpec((1, THW, Cin), lambda nc, k: (nc, k, 0)),
        ],
        out_specs=pl.BlockSpec((1, k_total, Cin), lambda nc, k: (nc, 0, 0)),
        compiler_params=pltpu.CompilerParams(
            dimension_semantics=("parallel", "arbitrary"),
            vmem_limit_bytes=_vmem_limit(pool_blocks)),
    )(A_c, xf_c)

    # ---- kernel B: tiny per-batch epilogue (1x1 conv + BN + ReLU + fold -> G) ----
    pp = pp.reshape(N, CHUNKS, k_total, Cin)
    epi_blocks = [((1, CHUNKS, k_total, Cin), jnp.float32),
                  ((k_total, 1), jnp.float32),
                  ((ns, Cin, hid), jnp.float32),
                  ((ns, 2, hid), jnp.float32),
                  ((ns * hid, 9 * Coutp), jnp.float32),
                  ((1, k_total, 9 * Coutp), jnp.float32)]
    epi_scratch = [((k_total, ns * hid), jnp.float32)]
    g = pl.pallas_call(
        make_epilogue_kernel(pool_scales, hid, CHUNKS),
        out_shape=jax.ShapeDtypeStruct((N, k_total, 9 * Coutp), jnp.float32),
        grid=(N,),
        in_specs=[
            pl.BlockSpec((1, CHUNKS, k_total, Cin), lambda n: (n, 0, 0, 0)),
            pl.BlockSpec((k_total, 1), lambda n: (0, 0)),
            pl.BlockSpec((ns, Cin, hid), lambda n: (0, 0, 0)),
            pl.BlockSpec((ns, 2, hid), lambda n: (0, 0, 0)),
            pl.BlockSpec((ns * hid, 9 * Coutp), lambda n: (0, 0)),
        ],
        out_specs=pl.BlockSpec((1, k_total, 9 * Coutp), lambda n: (n, 0, 0)),
        scratch_shapes=[pltpu.VMEM((k_total, ns * hid), jnp.float32)],
        compiler_params=pltpu.CompilerParams(
            dimension_semantics=("parallel",),
            vmem_limit_bytes=_vmem_limit(epi_blocks, epi_scratch)),
    )(pp, inv_area, w_all, sb_all, wku9)
    # free reshape: row order becomes k*9 + tap, matching Up3 column order
    g = g.astype(jnp.bfloat16).reshape(N, k9, Coutp)

    # ---- kernel C: halo-tiled 3x3 fusion conv, no concat ever materialized ----
    fusion_blocks = [((1, SLAB, Cin), jnp.bfloat16),
                     ((M, k9), jnp.bfloat16),
                     ((1, k9, Coutp), jnp.bfloat16),
                     ((9, Cin, Coutp), jnp.bfloat16),
                     ((2, Coutp), jnp.float32),
                     ((1, M, Coutp), jnp.bfloat16),
                     ((M, Coutp), jnp.float32)]        # f32 accumulator value
    out_flat = pl.pallas_call(
        make_fusion_kernel(Wfp, M),
        out_shape=jax.ShapeDtypeStruct((N, H * Wfp, Coutp), jnp.bfloat16),
        grid=(N, n_rt),
        in_specs=[
            pl.BlockSpec((1, SLAB, Cin), lambda n, t: (n * n_rt + t, 0, 0)),
            pl.BlockSpec((M, k9), lambda n, t: (t, 0)),
            pl.BlockSpec((1, k9, Coutp), lambda n, t: (n, 0, 0)),
            pl.BlockSpec((9, Cin, Coutp), lambda n, t: (0, 0, 0)),
            pl.BlockSpec((2, Coutp), lambda n, t: (0, 0)),
        ],
        out_specs=pl.BlockSpec((1, M, Coutp), lambda n, t: (n, t, 0)),
        compiler_params=pltpu.CompilerParams(
            dimension_semantics=("parallel", "parallel"),
            vmem_limit_bytes=_vmem_limit(fusion_blocks)),
    )(xp_tiles, Up3, g, wkx, sb2)

    # strip padded columns / channels; return NCHW f32 to match the module.
    # (A consumer accepting NHWC bf16 could take out_flat directly and skip this.)
    out = out_flat.reshape(N, H, Wfp, Coutp)[:, :, :W, :Cout].astype(jnp.float32)
    return jnp.transpose(out, (0, 3, 1, 2))


# ------------------------------- pure-JAX reference ------------------------- #

def reference_forward(x_nchw, params, pool_scales):
    """Faithful (pool -> 1x1 -> upsample -> concat -> 3x3 conv) reference.
    Static operands that the kernel carries in bf16 (x, the x-part of the 3x3
    weights, the bilinear matrix) are rounded identically here; the remaining
    bf16 roundings in the kernel (G, output) are covered by the test tolerance."""
    N, Cin, H, W = x_nchw.shape
    hid = Cin // 4
    HW = H * W
    x_bf = jnp.transpose(x_nchw, (0, 2, 3, 1)).astype(jnp.bfloat16)
    xf = x_bf.reshape(N, HW, Cin).astype(jnp.float32)
    ups = []
    for s, p in zip(pool_scales, params["pool"]):
        mb, inv = adaptive_pool_membership(H, W, s)
        A = jnp.asarray(mb * inv[:, None])
        Uh = bilinear_matrix_1d(H, s)
        Uw = bilinear_matrix_1d(W, s)
        U = jnp.asarray(np.einsum("hi,wj->hwij", Uh, Uw).reshape(HW, s * s))
        U = U.astype(jnp.bfloat16).astype(jnp.float32)   # mirror static rounding
        sb = fold_bn(p)
        pooled = jnp.einsum("kp,npc->nkc", A, xf)
        y = jnp.maximum(jnp.einsum("nkc,cd->nkd", pooled, p["w"]) * sb[0] + sb[1], 0.0)
        up = jnp.einsum("pk,nkd->npd", U, y)
        ups.append(up.reshape(N, H, W, hid))
    cat = jnp.concatenate([x_bf.astype(jnp.float32)] + ups, axis=-1)
    W3 = params["fusion"]["w"]
    W3_eff = jnp.concatenate(
        [W3[:, :, :Cin, :].astype(jnp.bfloat16).astype(jnp.float32), W3[:, :, Cin:, :]],
        axis=2)
    conv = jax.lax.conv_general_dilated(
        cat, W3_eff, (1, 1), "SAME", dimension_numbers=("NHWC", "HWIO", "NHWC"))
    sb2 = fold_bn(params["fusion"])
    out = jnp.maximum(conv * sb2[0] + sb2[1], 0.0)
    return jnp.transpose(out, (0, 3, 1, 2))


# ------------------------------------ main ----------------------------------- #

if __name__ == "__main__":
    key = jax.random.PRNGKey(0)
    N, Cin, H, W = 2, 16, 16, 16      # small stand-in for (N, 512, H, W)
    Cout = 8                          # small stand-in for out_channel=64
    pool_scales = [1, 2, 3, 6]

    k_x, k_p = jax.random.split(key)
    x = jax.random.normal(k_x, (N, Cin, H, W), jnp.float32)
    params = init_params(k_p, Cin, Cout, pool_scales)

    out = pyramid_pooling_module(x, params, pool_scales)
    out = jax.block_until_ready(out)

    ref = reference_forward(x, params, pool_scales)
    # bf16 pyramid-fold (G) and bf16 output storage are not mirrored in the
    # f32 reference -> tolerance set accordingly.
    np.testing.assert_allclose(np.asarray(out), np.asarray(ref), rtol=2e-2, atol=2e-2)

    print("KERNEL_OK")
</pallas_src>

<mosaic_0001>
module attributes {stable_mosaic.version = 11 : i64} {
  func.func @pool_sum_kernel(%arg0: i32, %arg1: i32, %arg2: memref<1x50x128xbf16, #tpu.memory_space<vmem>>, %arg3: memref<1x128x16xbf16, #tpu.memory_space<vmem>>, %arg4: memref<1x50x16xf32, #tpu.memory_space<vmem>>) attributes {dimension_semantics = [#tpu.dimension_semantics<parallel>, #tpu.dimension_semantics<arbitrary>], iteration_bounds = array<i64: 4, 1>, scalar_prefetch = 0 : i64, scratch_operands = 0 : i64, tpu.core_type = #tpu.core_type<tc>, window_params = [{transform_indices = @transform_0, window_bounds = array<i64: 1, 50, 128>}, {transform_indices = @transform_1, window_bounds = array<i64: 1, 128, 16>}, {transform_indices = @transform_2, window_bounds = array<i64: 1, 50, 16>}]} {
    %c0 = arith.constant 0 : index
    %c0_0 = arith.constant 0 : index
    %c0_1 = arith.constant 0 : index
    %0 = vector.load %arg2[%c0, %c0_0, %c0_1] : memref<1x50x128xbf16, #tpu.memory_space<vmem>>, vector<1x50x128xbf16>
    %1 = vector.shape_cast %0 : vector<1x50x128xbf16> to vector<50x128xbf16>
    %c0_2 = arith.constant 0 : index
    %c0_3 = arith.constant 0 : index
    %c0_4 = arith.constant 0 : index
    %2 = vector.load %arg3[%c0_2, %c0_3, %c0_4] : memref<1x128x16xbf16, #tpu.memory_space<vmem>>, vector<1x128x16xbf16>
    %3 = vector.shape_cast %2 : vector<1x128x16xbf16> to vector<128x16xbf16>
    %cst = arith.constant dense<0.000000e+00> : vector<50x16xf32>
    %4 = tpu.matmul %1, %3, %cst {dimension_numbers = #tpu.dot_dimension_numbers<[1], [0], [0], [1], [0, 0, 1, 1], [], []>} : vector<50x128xbf16>, vector<128x16xbf16>, vector<50x16xf32> -> vector<50x16xf32>
    %c0_i32 = arith.constant 0 : i32
    %5 = arith.cmpi eq, %arg1, %c0_i32 : i32
    %6 = arith.extui %5 : i1 to i32
    %c0_i32_5 = arith.constant 0 : i32
    %7 = arith.cmpi ne, %6, %c0_i32_5 : i32
    scf.if %7 {
      %c0_8 = arith.constant 0 : index
      %c0_9 = arith.constant 0 : index
      %c0_10 = arith.constant 0 : index
      %11 = vector.load %arg4[%c0_8, %c0_9, %c0_10] : memref<1x50x16xf32, #tpu.memory_space<vmem>>, vector<1x50x16xf32>
      %12 = vector.shape_cast %11 : vector<1x50x16xf32> to vector<50x16xf32>
      %13 = vector.shape_cast %4 : vector<50x16xf32> to vector<1x50x16xf32>
      tpu.vector_store %arg4[%c0_8, %c0_9, %c0_10], %13 {strides = array<i32>} : memref<1x50x16xf32, #tpu.memory_space<vmem>>, vector<1x50x16xf32>,
    } else {
    }
    %c0_i32_6 = arith.constant 0 : i32
    %8 = arith.cmpi ne, %arg1, %c0_i32_6 : i32
    %9 = arith.extui %8 : i1 to i32
    %c0_i32_7 = arith.constant 0 : i32
    %10 = arith.cmpi ne, %9, %c0_i32_7 : i32
    scf.if %10 {
      %c0_8 = arith.constant 0 : index
      %c0_9 = arith.constant 0 : index
      %c0_10 = arith.constant 0 : index
      %11 = vector.load %arg4[%c0_8, %c0_9, %c0_10] : memref<1x50x16xf32, #tpu.memory_space<vmem>>, vector<1x50x16xf32>
      %12 = vector.shape_cast %11 : vector<1x50x16xf32> to vector<50x16xf32>
      %13 = arith.addf %12, %4 : vector<50x16xf32>
      %c0_11 = arith.constant 0 : index
      %c0_12 = arith.constant 0 : index
      %c0_13 = arith.constant 0 : index
      %14 = vector.load %arg4[%c0_11, %c0_12, %c0_13] : memref<1x50x16xf32, #tpu.memory_space<vmem>>, vector<1x50x16xf32>
      %15 = vector.shape_cast %14 : vector<1x50x16xf32> to vector<50x16xf32>
      %16 = vector.shape_cast %13 : vector<50x16xf32> to vector<1x50x16xf32>
      tpu.vector_store %arg4[%c0_11, %c0_12, %c0_13], %16 {strides = array<i32>} : memref<1x50x16xf32, #tpu.memory_space<vmem>>, vector<1x50x16xf32>,
    } else {
    }
    return
  }
  func.func @transform_0(%arg0: i32, %arg1: i32) -> (i32, i32, i32) {
    %c2_i32 = arith.constant 2 : i32
    %c0_i32 = arith.constant 0 : i32
    %0 = arith.cmpi eq, %c2_i32, %c0_i32 : i32
    %c1_i32 = arith.constant 1 : i32
    %1 = arith.select %0, %c1_i32, %c2_i32 : i32
    %2 = arith.remsi %arg0, %1 : i32
    %c0_i32_0 = arith.constant 0 : i32
    %3 = arith.cmpi ne, %2, %c0_i32_0 : i32
    %c0_i32_1 = arith.constant 0 : i32
    %4 = arith.cmpi slt, %2, %c0_i32_1 : i32
    %c0_i32_2 = arith.constant 0 : i32
    %5 = arith.cmpi slt, %1, %c0_i32_2 : i32
    %6 = arith.xori %4, %5 : i1
    %7 = arith.andi %6, %3 : i1
    %8 = arith.addi %2, %1 : i32
    %9 = arith.select %7, %8, %2 : i32
    %c0_i32_3 = arith.constant 0 : i32
    %c0_i32_4 = arith.constant 0 : i32
    return %9, %c0_i32_3, %arg1 : i32, i32, i32
  }
  func.func @transform_1(%arg0: i32, %arg1: i32) -> (i32, i32, i32) {
    %c0_i32 = arith.constant 0 : i32
    %c0_i32_0 = arith.constant 0 : i32
    return %arg0, %arg1, %c0_i32 : i32, i32, i32
  }
  func.func @transform_2(%arg0: i32, %arg1: i32) -> (i32, i32, i32) {
    %c0_i32 = arith.constant 0 : i32
    %c0_i32_0 = arith.constant 0 : i32
    %c0_i32_1 = arith.constant 0 : i32
    return %arg0, %c0_i32, %c0_i32_0 : i32, i32, i32
  }
}

</mosaic_0001>

<llo_original>
// kernel: tpu_custom_call.1
$region0: #{tpu_custom_call.1}
  #allocation0 [shape = 'u32[]', space=smem, size = 0x4, offset = 0x4, fixed_abs, tag = 'smem constant byte address 0x4 - core index']
  #allocation1 [shape = 'u32[144,128]{1,0:T(1,128)}', space=vmem, size = 0x12000, scoped, tag = 'internal scratch']
  %s0 = inlined_call_operand.vmem [shape: bf16[2,50,128], index: 0, kind: input, shape index: {}]
  %s1 = inlined_call_operand.vmem [shape: bf16[4,128,16], index: 1, kind: input, shape index: {}]
  %s2 = inlined_call_operand.vmem [shape: f32[4,50,16], index: 2, kind: output, shape index: {}]
  %s3 = sld [smem:[#allocation0]]
  $region49: #{tpu_custom_call.1} parent=0
    _
  %s5 = ssub.s32 1, %s3
  %s6 = scalar_select 0, %s5, %s3
  loop: start=0, step=1, limit=6
  $region2: #{tpu_custom_call.1} parent=0 // loop_pre_header
    _
  $region3: #{tpu_custom_call.1} parent=0 // loop_header
    %s8 = sphi 0, %s12
    %p9 = scmp.ge.s32.totalorder %s8, 6
    %s15 = sphi 0, %s27
    %s16 = sphi 0, %s23
    %s17 = sphi 0, %s15
    %s18 = sphi 0, %s16
    %s19 = sphi 0, %s17
    %s20 = sphi 0, %s18
    %s56 = sphi 0, %s58
    %s59 = sphi 0, %s56
    %s60 = sphi 0, %s59
    %s76 = sphi 0, %s60
    %s84 = sphi 0, %s86
    %s87 = sphi 0, %s84
    %s88 = sphi 0, %s87
    %s104 = sphi 0, %s88
    %s110 = sphi 0, %s112
    %s113 = sphi 0, %s110
    %s114 = sphi 0, %s113
    %s130 = sphi 0, %s114
  $region4: #{tpu_custom_call.1} parent=0 // loop_header_branch
    %11 = sbr.rel (%p9) target = $region8
  $region5: #{tpu_custom_call.1} parent=0 // loop_body
    %s13 = ssub.s32 %s8, 1
    %s14 = ssub.s32 %s8, 2
    %s21 = sadd.s32 1, %s16
    %p22 = scmp.ge.s32.totalorder %s21, 1
    %s23 = scalar_select %p22, 0, %s21
    %s24 = sadd.s32 1, %s15
    %s25 = scalar_select %p22, %s24, %s15
    %p26 = scmp.ge.s32.totalorder %s25, 4
    %s27 = scalar_select %p26, 0, %s25
    %p28 = scmp.lt.s32.totalorder %s15, 0
    %s29 = ssub.s32 0, %s15
    %s30 = scalar_select %p28, %s29, %s15
    %s31 = sand.u32 %s30, 1
    %s32 = ssub.s32 0, %s31
    %s33 = scalar_select %p28, %s32, %s31
    %p34 = scmp.ne.s32.totalorder %s33, 0
    %p35 = scmp.lt.s32.totalorder %s33, 0
    %p36 = pnand %p35, %p34
    %p37 = pneg %p36
    %s38 = sadd.s32 %s33, 2
    %s39 = scalar_select %p37, %s38, %s33
    %p40 = scmp.lt.s32.totalorder %s27, 0
    %s41 = ssub.s32 0, %s27
    %s42 = scalar_select %p40, %s41, %s27
    %s43 = sand.u32 %s42, 1
    %s44 = ssub.s32 0, %s43
    %s45 = scalar_select %p40, %s44, %s43
    %p46 = scmp.ne.s32.totalorder %s45, 0
    %p47 = scmp.lt.s32.totalorder %s45, 0
    %p48 = pnand %p47, %p46
    %p49 = pneg %p48
    %s50 = sadd.s32 %s45, 2
    %s51 = scalar_select %p49, %s50, %s45
    %s52 = ssub.s32 %s39, %s51
    %s53 = ssub.s32 %s16, %s23
    %s54 = sor.u32 %s52, %s53
    %p55 = scmp.eq.s32.totalorder %s54, 0
    %s57 = sadd.s32 %s56, 1
    %s58 = scalar_select %p55, %s56, %s57
    %p61 = pneg %p55
    %p62 = scmp.eq.s32.totalorder %s8, 3
    %p63 = por %p61, %p62
    %p64 = scmp.ne.s32.totalorder %s56, %s59
    %p65 = scmp.eq.s32.totalorder %s8, 0
    %p66 = por %p64, %p65
    %p67 = scmp.ne.s32.totalorder %s56, %s59
    %p68 = scmp.eq.s32.totalorder %s13, 3
    %p69 = por %p67, %p68
    %p70 = scmp.ne.s32.totalorder %s59, %s60
    %p71 = scmp.eq.s32.totalorder %s13, 0
    %p72 = por %p70, %p71
    %p73 = scmp.ne.s32.totalorder %s59, %s60
    %p74 = scmp.eq.s32.totalorder %s14, 3
    %p75 = por %p73, %p74
    %p77 = scmp.ne.s32.totalorder %s60, %s76
    %p78 = scmp.eq.s32.totalorder %s14, 0
    %p79 = por %p77, %p78
    %s80 = ssub.s32 %s15, %s27
    %s81 = ssub.s32 %s16, %s23
    %s82 = sor.u32 %s80, %s81
    %p83 = scmp.eq.s32.totalorder %s82, 0
    %s85 = sadd.s32 %s84, 1
    %s86 = scalar_select %p83, %s84, %s85
    %p89 = pneg %p83
    %p90 = scmp.eq.s32.totalorder %s8, 3
    %p91 = por %p89, %p90
    %p92 = scmp.ne.s32.totalorder %s84, %s87
    %p93 = scmp.eq.s32.totalorder %s8, 0
    %p94 = por %p92, %p93
    %p95 = scmp.ne.s32.totalorder %s84, %s87
    %p96 = scmp.eq.s32.totalorder %s13, 3
    %p97 = por %p95, %p96
    %p98 = scmp.ne.s32.totalorder %s87, %s88
    %p99 = scmp.eq.s32.totalorder %s13, 0
    %p100 = por %p98, %p99
    %p101 = scmp.ne.s32.totalorder %s87, %s88
    %p102 = scmp.eq.s32.totalorder %s14, 3
    %p103 = por %p101, %p102
    %p105 = scmp.ne.s32.totalorder %s88, %s104
    %p106 = scmp.eq.s32.totalorder %s14, 0
    %p107 = por %p105, %p106
    %s108 = ssub.s32 %s15, %s27
    %p109 = scmp.eq.s32.totalorder %s108, 0
    %s111 = sadd.s32 %s110, 1
    %s112 = scalar_select %p109, %s110, %s111
    %p115 = pneg %p109
    %p116 = scmp.eq.s32.totalorder %s8, 3
    %p117 = por %p115, %p116
    %p118 = scmp.ne.s32.totalorder %s110, %s113
    %p119 = scmp.eq.s32.totalorder %s8, 0
    %p120 = por %p118, %p119
    %p121 = scmp.ne.s32.totalorder %s110, %s113
    %p122 = scmp.eq.s32.totalorder %s13, 3
    %p123 = por %p121, %p122
    %p124 = scmp.ne.s32.totalorder %s113, %s114
    %p125 = scmp.eq.s32.totalorder %s13, 0
    %p126 = por %p124, %p125
    %p127 = scmp.ne.s32.totalorder %s113, %s114
    %p128 = scmp.eq.s32.totalorder %s14, 3
    %p129 = por %p127, %p128
    %p131 = scmp.ne.s32.totalorder %s114, %s130
    %p132 = scmp.eq.s32.totalorder %s14, 0
    %p133 = por %p131, %p132
    %p134 = scmp.le.s32.totalorder 1, %s8
    %p135 = scmp.lt.s32.totalorder %s8, 5
    %p136 = pnand %p134, %p135
    %p137 = pneg %p136
    // Predicated region
    $region9: #{tpu_custom_call.1} parent=5 // pred_check
      _
    $region10: #{tpu_custom_call.1} parent=5 // pred_check_branch
      %139 = sbr.rel (%p136) target = $region12
    $region11: #{tpu_custom_call.1} parent=5 // pred_region
      %s140 = ssub.s32 %s8, 1
    $region12: #{tpu_custom_call.1} parent=5 // pred_fallthru
      _
    %p141 = scmp.lt.s32.totalorder %s8, 4
    // Predicated region
    $region13: #{tpu_custom_call.1} parent=5 // pred_check
      %p142 = pneg %p141
    $region14: #{tpu_custom_call.1} parent=5 // pred_check_branch
      %144 = sbr.rel (%p142) target = $region16
    $region15: #{tpu_custom_call.1} parent=5 // pred_region
      // Predicated region
      $region17: #{tpu_custom_call.1} parent=15 // pred_check
        %p145 = pneg %p66
      $region18: #{tpu_custom_call.1} parent=15 // pred_check_branch
        %147 = sbr.rel (%p145) target = $region20
      $region19: #{tpu_custom_call.1} parent=15 // pred_region
        %p148 = scmp.lt.s32.totalorder %s15, 0
        %s149 = ssub.s32 0, %s15
        %s150 = scalar_select %p148, %s149, %s15
        %s151 = sand.u32 %s150, 1
        %s152 = ssub.s32 0, %s151
        %s153 = scalar_select %p148, %s152, %s151
        %p154 = scmp.ne.s32.totalorder %s153, 0
        %p155 = scmp.lt.s32.totalorder %s153, 0
        %p156 = pnand %p155, %p154
        %p157 = pneg %p156
        %s158 = sadd.s32 %s153, 2
        %s159 = scalar_select %p157, %s158, %s153
        %p160 = scmp.lt.s32.totalorder %s159, 1
        %s161 = scalar_select %p160, %s159, 1
        %p162 = scmp.lt.s32.totalorder %s16, 0
        %s163 = scalar_select %p162, %s16, 0
        %s164 = smul.addr %s161, 7
        %s165 = sadd.s32 %s163, %s164
        %s166 = smul.addr %s165, 4
        %s167 = scalar_lea.vmem %s0, %s166
        %p168 = scmp.lt.s32.totalorder %s15, 0
        %s169 = ssub.s32 0, %s15
        %s170 = scalar_select %p168, %s169, %s15
        %s171 = sand.u32 %s170, 1
        %s172 = ssub.s32 0, %s171
        %s173 = scalar_select %p168, %s172, %s171
        %p174 = scmp.ne.s32.totalorder %s173, 0
        %p175 = scmp.lt.s32.totalorder %s173, 0
        %p176 = pnand %p175, %p174
        %p177 = pneg %p176
        %s178 = sadd.s32 %s173, 2
        %s179 = scalar_select %p177, %s178, %s173
      $region20: #{tpu_custom_call.1} parent=15 // pred_fallthru
        _
      // Predicated region
      $region21: #{tpu_custom_call.1} parent=15 // pred_check
        %p180 = pneg %p94
      $region22: #{tpu_custom_call.1} parent=15 // pred_check_branch
        %182 = sbr.rel (%p180) target = $region24
      $region23: #{tpu_custom_call.1} parent=15 // pred_region
        %s183 = smul.u32 16, %s16
        %p184 = scmp.lt.s32.totalorder %s15, 3
        %s185 = scalar_select %p184, %s15, 3
        %p186 = scmp.lt.s32.totalorder %s183, 15
        %s187 = scalar_select %p186, %s183, 15
        %s188 = smul.addr %s185, 16
        %s189 = sadd.s32 %s187, %s188
        %s190 = smul.addr %s189, 4
        %s191 = scalar_lea.vmem %s1, %s190
        %s192 = smul.u32 16, %s16
      $region24: #{tpu_custom_call.1} parent=15 // pred_fallthru
        _
    $region16: #{tpu_custom_call.1} parent=5 // pred_fallthru
      _
    %p193 = scmp.le.s32.totalorder 1, %s8
    %p194 = scmp.lt.s32.totalorder %s8, 5
    %p195 = pnand %p193, %p194
    %p196 = pneg %p195
    // Predicated region
    $region25: #{tpu_custom_call.1} parent=5 // pred_check
      _
    $region26: #{tpu_custom_call.1} parent=5 // pred_check_branch
      %198 = sbr.rel (%p195) target = $region28
    $region27: #{tpu_custom_call.1} parent=5 // pred_region
      %s199 = ssub.s32 %s8, 1
      %p200 = scmp.lt.s32.totalorder %s17, 0
      %s201 = ssub.s32 0, %s17
      %s202 = scalar_select %p200, %s201, %s17
      %s203 = sand.u32 %s202, 1
      %s204 = ssub.s32 0, %s203
      %s205 = scalar_select %p200, %s204, %s203
      %p206 = scmp.ne.s32.totalorder %s205, 0
      %p207 = scmp.lt.s32.totalorder %s205, 0
      %p208 = pnand %p207, %p206
      %p209 = pneg %p208
      %s210 = sadd.s32 %s205, 2
      %s211 = scalar_select %p209, %s210, %s205
      %p212 = scmp.lt.s32.totalorder %s211, 1
      %s213 = scalar_select %p212, %s211, 1
      %p214 = scmp.lt.s32.totalorder %s18, 0
      %s215 = scalar_select %p214, %s18, 0
      %s216 = smul.addr %s213, 7
      %s217 = sadd.s32 %s215, %s216
      %s218 = smul.addr %s217, 4
      %s219 = scalar_lea.vmem %s0, %s218
      %p220 = pneg %p72
      %p221 = pneg %p69
      %s222 = smul.u32 16, %s18
      %p223 = scmp.lt.s32.totalorder %s17, 3
      %s224 = scalar_select %p223, %s17, 3
      %p225 = scmp.lt.s32.totalorder %s222, 15
      %s226 = scalar_select %p225, %s222, 15
      %s227 = smul.addr %s224, 16
      %s228 = sadd.s32 %s226, %s227
      %s229 = smul.addr %s228, 4
      %s230 = scalar_lea.vmem %s1, %s229
      %p231 = pneg %p100
      %p232 = pneg %p97
      %p233 = pneg %p126
      %p234 = pneg %p123
      %p235 = scmp.lt.s32.totalorder %s17, 3
      %s236 = scalar_select %p235, %s17, 3
      %s237 = smul.addr %s236, 7
      %s238 = smul.addr %s237, 8
      %s239 = scalar_lea.vmem %s2, %s238
      %p240 = scmp.lt.s32.totalorder %s17, 0
      %s241 = ssub.s32 0, %s17
      %s242 = scalar_select %p240, %s241, %s17
      %s243 = sand.u32 %s242, 1
      %s244 = ssub.s32 0, %s243
      %s245 = scalar_select %p240, %s244, %s243
      %p246 = scmp.ne.s32.totalorder %s245, 0
      %p247 = scmp.lt.s32.totalorder %s245, 0
      %p248 = pnand %p247, %p246
      %p249 = pneg %p248
      %s250 = sadd.s32 %s245, 2
      %s251 = scalar_select %p249, %s250, %s245
      %p252 = scmp.lt.s32.totalorder %s251, 1
      %s253 = scalar_select %p252, %s251, 1
      %p254 = scmp.lt.s32.totalorder %s18, 0
      %s255 = scalar_select %p254, %s18, 0
      %s256 = smul.addr %s253, 7
      %s257 = sadd.s32 %s255, %s256
      %s258 = smul.addr %s257, 4
      %s259 = scalar_lea.vmem %s0, %s258
      %p260 = scmp.lt.s32.totalorder %s17, 0
      %s261 = ssub.s32 0, %s17
      %s262 = scalar_select %p260, %s261, %s17
      %s263 = sand.u32 %s262, 1
      %s264 = ssub.s32 0, %s263
      %s265 = scalar_select %p260, %s264, %s263
      %p266 = scmp.ne.s32.totalorder %s265, 0
      %p267 = scmp.lt.s32.totalorder %s265, 0
      %p268 = pnand %p267, %p266
      %p269 = pneg %p268
      %s270 = sadd.s32 %s265, 2
      %s271 = scalar_select %p269, %s270, %s265
      %s272 = smul.u32 16, %s18
      %p273 = scmp.lt.s32.totalorder %s17, 3
      %s274 = scalar_select %p273, %s17, 3
      %p275 = scmp.lt.s32.totalorder %s272, 15
      %s276 = scalar_select %p275, %s272, 15
      %s277 = smul.addr %s274, 16
      %s278 = sadd.s32 %s276, %s277
      %s279 = smul.addr %s278, 4
      %s280 = scalar_lea.vmem %s1, %s279
      %s281 = smul.u32 16, %s18
      %p282 = scmp.lt.s32.totalorder %s17, 3
      %s283 = scalar_select %p282, %s17, 3
      %s284 = smul.addr %s283, 7
      %s285 = smul.addr %s284, 8
      %s286 = scalar_lea.vmem %s2, %s285
      %v288 = vld [vmem:[%s259] sm:$0xf]
      %v289 = vld [vmem:[%s259 + $0x4] sm:$0xf]
      %v290 = vld [vmem:[%s259 + $0x8] sm:$0xf]
      %v291 = vld [vmem:[%s259 + $0xc] sm:$0xf]
      %v292 = vld [vmem:[%s259 + $0x10] sm:$0xf]
      %v293 = vld [vmem:[%s259 + $0x14] sm:$0xf]
      %v294 = vld [vmem:[%s259 + $0x18] sm:$0x1]
      %v295 = vld [vmem:[%s280] sm:$0xf]
      %v296 = vld [vmem:[%s280 + $0x4] sm:$0xf]
      %v297 = vld [vmem:[%s280 + $0x8] sm:$0xf]
      %v298 = vld [vmem:[%s280 + $0xc] sm:$0xf]
      %v299 = vld [vmem:[%s280 + $0x10] sm:$0xf]
      %v300 = vld [vmem:[%s280 + $0x14] sm:$0xf]
      %v301 = vld [vmem:[%s280 + $0x18] sm:$0xf]
      %v302 = vld [vmem:[%s280 + $0x1c] sm:$0xf]
      %v303 = vld [vmem:[%s280 + $0x20] sm:$0xf]
      %v304 = vld [vmem:[%s280 + $0x24] sm:$0xf]
      %v305 = vld [vmem:[%s280 + $0x28] sm:$0xf]
      %v306 = vld [vmem:[%s280 + $0x2c] sm:$0xf]
      %v307 = vld [vmem:[%s280 + $0x30] sm:$0xf]
      %v308 = vld [vmem:[%s280 + $0x34] sm:$0xf]
      %v309 = vld [vmem:[%s280 + $0x38] sm:$0xf]
      %v310 = vld [vmem:[%s280 + $0x3c] sm:$0xf]
      %v318 = vunpack.c.l.b16 %v288
      %v319 = vunpack.c.l.b16 %v289
      %v320 = vunpack.c.l.b16 %v290
      %v321 = vunpack.c.l.b16 %v291
      %v322 = vunpack.c.l.b16 %v292
      %v323 = vunpack.c.l.b16 %v293
      %v324 = vunpack.c.l.b16 %v294
      %v325 = vpack.c.b16 %v319, %v318
      %v326 = vpack.c.b16 %v321, %v320
      %v327 = vpack.c.b16 %v323, %v322
      %v328 = vpack.c.b16 %v324, %v324
      %v349 = vunpack.c.l.b16 %v295
      %v350 = vunpack.c.l.b16 %v296
      %v351 = vunpack.c.l.b16 %v297
      %v352 = vunpack.c.l.b16 %v298
      %v353 = vunpack.c.l.b16 %v299
      %v354 = vunpack.c.l.b16 %v300
      %v355 = vunpack.c.l.b16 %v301
      %v356 = vunpack.c.l.b16 %v302
      %v357 = vunpack.c.l.b16 %v303
      %v358 = vunpack.c.l.b16 %v304
      %v359 = vunpack.c.l.b16 %v305
      %v360 = vunpack.c.l.b16 %v306
      %v361 = vunpack.c.l.b16 %v307
      %v362 = vunpack.c.l.b16 %v308
      %v363 = vunpack.c.l.b16 %v309
      %v364 = vunpack.c.l.b16 %v310
      %v365 = vpack.c.b16 %v350, %v349
      %v366 = vpack.c.b16 %v352, %v351
      %v367 = vpack.c.b16 %v354, %v353
      %v368 = vpack.c.b16 %v356, %v355
      %v369 = vpack.c.b16 %v358, %v357
      %v370 = vpack.c.b16 %v360, %v359
      %v371 = vpack.c.b16 %v362, %v361
      %v372 = vpack.c.b16 %v364, %v363
      %381 = vmatprep.subr.bf16.mxu0 0
      %382 = vmatpush1.bf16.msra.mxu0 %v365
      %383 = vmatprep.subr.bf16.mxu0 0
      %384 = vmatpush1.bf16.msra.mxu0 %v366
      %385 = vmatprep.subr.bf16.mxu0 0
      %386 = vmatpush1.bf16.msra.mxu0 %v367
      %387 = vmatprep.subr.bf16.mxu0 0
      %388 = vmatpush1.bf16.msra.mxu0 %v368
      %389 = vmatprep.subr.bf16.mxu0 0
      %390 = vmatpush1.bf16.msra.mxu0 %v369
      %391 = vmatprep.subr.bf16.mxu0 0
      %392 = vmatpush1.bf16.msra.mxu0 %v370
      %393 = vmatprep.subr.bf16.mxu0 0
      %394 = vmatpush1.bf16.msra.mxu0 %v371
      %395 = vmatprep.subr.bf16.mxu0 0
      %396 = vmatpush1.bf16.msra.mxu0 %v372
      %397 = vmatprep.subr.bf16.mxu0 0
      %398 = vmatpush1.bf16.msra.mxu0 0
      %399 = vmatprep.subr.bf16.mxu0 0
      %400 = vmatpush1.bf16.msra.mxu0 0
      %401 = vmatprep.subr.bf16.mxu0 0
      %402 = vmatpush1.bf16.msra.mxu0 0
      %403 = vmatprep.subr.bf16.mxu0 0
      %404 = vmatpush1.bf16.msra.mxu0 0
      %405 = vmatprep.subr.bf16.mxu0 0
      %406 = vmatpush1.bf16.msra.mxu0 0
      %407 = vmatprep.subr.bf16.mxu0 0
      %408 = vmatpush1.bf16.msra.mxu0 0
      %409 = vmatprep.subr.bf16.mxu0 0
      %410 = vmatpush1.bf16.msra.mxu0 0
      %411 = vmatprep.subr.bf16.mxu0 0
      %412 = vmatpush1.bf16.msra.mxu0 0
      %413 = vmatprep.mubr.bf16.mxu0 0
      %414 = vmatmul.mubr.bf16.gmra.mrb[0].mxu0 %v325
      %v415 = vpop.f32.mrb[0].mxu0
      %v416 = vadd.f32 0.0, %v415
      %v417 = vpop.f32.mrb[0].mxu0
      %v418 = vpop.f32.mrb[0].mxu0
      %v419 = vadd.f32 0.0, %v418
      %v420 = vpop.f32.mrb[0].mxu0
      %421 = vmatprep.mubr.bf16.mxu0 0
      %422 = vmatmul.mubr.bf16.gmra.mrb[0].mxu0 %v326
      %v423 = vpop.f32.mrb[0].mxu0
      %v424 = vadd.f32 0.0, %v423
      %v425 = vpop.f32.mrb[0].mxu0
      %v426 = vpop.f32.mrb[0].mxu0
      %v427 = vadd.f32 0.0, %v426
      %v428 = vpop.f32.mrb[0].mxu0
      %429 = vmatprep.mubr.bf16.mxu0 0
      %430 = vmatmul.mubr.bf16.gmra.mrb[0].mxu0 %v327
      %v431 = vpop.f32.mrb[0].mxu0
      %v432 = vadd.f32 0.0, %v431
      %v433 = vpop.f32.mrb[0].mxu0
      %v434 = vpop.f32.mrb[0].mxu0
      %v435 = vadd.f32 0.0, %v434
      %v436 = vpop.f32.mrb[0].mxu0
      %437 = vmatprep.mubr.bf16.mxu0 0
      %438 = vmatmul.mubr.bf16.gmra.mrb[0].mxu0 %v328
      %v439 = vpop.f32.mrb[0].mxu0
      %v440 = vadd.f32 0.0, %v439
      %v441 = vpop.f32.mrb[0].mxu0
      %v442 = vpop.f32.mrb[0].mxu0
      %v443 = vpop.f32.mrb[0].mxu0
      %444 = vdwg.mxu0
      %p445 = scmp.eq.s32.totalorder %s18, 0
      // Predicated region
      $region29: #{tpu_custom_call.1} parent=27 // pred_check
        %p446 = pneg %p445
      $region30: #{tpu_custom_call.1} parent=27 // pred_check_branch
        %448 = sbr.rel (%p446) target = $region32
      $region31: #{tpu_custom_call.1} parent=27 // pred_region
        %vm449 = vcmask 130048
        %450 = vst.msk [vmem:[%s286] sm:$0xff] %vm449, %v416
        %451 = vst.msk [vmem:[%s286 + $0x8] sm:$0xff] %vm449, %v419
        %452 = vst.msk [vmem:[%s286 + $0x10] sm:$0xff] %vm449, %v424
        %453 = vst.msk [vmem:[%s286 + $0x18] sm:$0xff] %vm449, %v427
        %454 = vst.msk [vmem:[%s286 + $0x20] sm:$0xff] %vm449, %v432
        %455 = vst.msk [vmem:[%s286 + $0x28] sm:$0xff] %vm449, %v435
        %vm456 = vcmask 123904
        %457 = vst.msk [vmem:[%s286 + $0x30] sm:$0x3] %vm456, %v440
      $region32: #{tpu_custom_call.1} parent=27 // pred_fallthru
        _
      %p458 = scmp.ne.s32.totalorder %s18, 0
      // Predicated region
      $region33: #{tpu_custom_call.1} parent=27 // pred_check
        %p459 = pneg %p458
      $region34: #{tpu_custom_call.1} parent=27 // pred_check_branch
        %461 = sbr.rel (%p459) target = $region36
      $region35: #{tpu_custom_call.1} parent=27 // pred_region
        %v462 = vld [vmem:[%s286] sm:$0xff]
        %v463 = vld [vmem:[%s286 + $0x8] sm:$0xff]
        %v464 = vld [vmem:[%s286 + $0x10] sm:$0xff]
        %v465 = vld [vmem:[%s286 + $0x18] sm:$0xff]
        %v466 = vld [vmem:[%s286 + $0x20] sm:$0xff]
        %v467 = vld [vmem:[%s286 + $0x28] sm:$0xff]
        %v468 = vld [vmem:[%s286 + $0x30] sm:$0x3]
        %v469 = vadd.f32 %v462, %v416
        %v470 = vadd.f32 %v463, %v419
        %v471 = vadd.f32 %v464, %v424
        %v472 = vadd.f32 %v465, %v427
        %v473 = vadd.f32 %v466, %v432
        %v474 = vadd.f32 %v467, %v435
        %v475 = vadd.f32 %v468, %v440
        %vm476 = vcmask 130048
        %477 = vst.msk [vmem:[%s286] sm:$0xff] %vm476, %v469
        %478 = vst.msk [vmem:[%s286 + $0x8] sm:$0xff] %vm476, %v470
        %479 = vst.msk [vmem:[%s286 + $0x10] sm:$0xff] %vm476, %v471
        %480 = vst.msk [vmem:[%s286 + $0x18] sm:$0xff] %vm476, %v472
        %481 = vst.msk [vmem:[%s286 + $0x20] sm:$0xff] %vm476, %v473
        %482 = vst.msk [vmem:[%s286 + $0x28] sm:$0xff] %vm476, %v474
        %vm483 = vcmask 123904
        %484 = vst.msk [vmem:[%s286 + $0x30] sm:$0x3] %vm483, %v475
      $region36: #{tpu_custom_call.1} parent=27 // pred_fallthru
        _
      %p485 = scmp.lt.s32.totalorder %s17, 3
      %s486 = scalar_select %p485, %s17, 3
      %s487 = smul.addr %s486, 7
      %s488 = smul.addr %s487, 8
      %s489 = scalar_lea.vmem %s2, %s488
      // Predicated region
      $region37: #{tpu_custom_call.1} parent=27 // pred_check
        %p490 = pneg %p123
      $region38: #{tpu_custom_call.1} parent=27 // pred_check_branch
        %492 = sbr.rel (%p490) target = $region40
      $region39: #{tpu_custom_call.1} parent=27 // pred_region
        _
      $region40: #{tpu_custom_call.1} parent=27 // pred_fallthru
        _
    $region28: #{tpu_custom_call.1} parent=5 // pred_fallthru
      _
    %p493 = scmp.le.s32.totalorder 2, %s8
    // Predicated region
    $region41: #{tpu_custom_call.1} parent=5 // pred_check
      %p494 = pneg %p493
    $region42: #{tpu_custom_call.1} parent=5 // pred_check_branch
      %496 = sbr.rel (%p494) target = $region44
    $region43: #{tpu_custom_call.1} parent=5 // pred_region
      %s497 = ssub.s32 %s8, 2
      // Predicated region
      $region45: #{tpu_custom_call.1} parent=43 // pred_check
        %p498 = pneg %p129
      $region46: #{tpu_custom_call.1} parent=43 // pred_check_branch
        %500 = sbr.rel (%p498) target = $region48
      $region47: #{tpu_custom_call.1} parent=43 // pred_region
        %p501 = scmp.lt.s32.totalorder %s19, 3
        %s502 = scalar_select %p501, %s19, 3
        %s503 = smul.addr %s502, 7
        %s504 = smul.addr %s503, 8
        %s505 = scalar_lea.vmem %s2, %s504
      $region48: #{tpu_custom_call.1} parent=43 // pred_fallthru
        _
    $region44: #{tpu_custom_call.1} parent=5 // pred_fallthru
      _
  $region6: #{tpu_custom_call.1} parent=0 // loop_footer
    %s12 = sadd.s32 1, %s8
  $region7: #{tpu_custom_call.1} parent=0 // loop_footer_branch
    %7 = sbr.rel target = $region3
  $region8: #{tpu_custom_call.1} parent=0 // loop_exit
    _

</llo_original>
